<compile_context>
chip_gen: v7x
topology: tpu7x:2x2x1
jax: 0.10.0
libtpu: 0.0.40
codegen_flags: <defaults>
</compile_context>

<pallas_src>
import functools

import numpy as np
import jax
import jax.numpy as jnp
from jax.experimental import pallas as pl
from jax.experimental.pallas import tpu as pltpu


# ---------------------------------------------------------------------------
# Entmax 1.5 (exact, sort-based) — tiny (k, D) parameter transform, plain JAX.
# ---------------------------------------------------------------------------
def entmax15(z, axis=-1):
    z = z / 2.0
    z_srt = -jnp.sort(-z, axis=axis)                      # descending
    n = z.shape[axis]
    rho = jnp.arange(1, n + 1, dtype=z.dtype)
    mean = jnp.cumsum(z_srt, axis=axis) / rho
    mean_sq = jnp.cumsum(z_srt * z_srt, axis=axis) / rho
    ss = rho * (mean_sq - mean * mean)
    delta = (1.0 - ss) / rho
    delta_nz = jnp.maximum(delta, 0.0)
    tau = mean - jnp.sqrt(delta_nz)
    support = jnp.sum((tau <= z_srt).astype(jnp.int32), axis=axis, keepdims=True)
    tau_star = jnp.take_along_axis(tau, support - 1, axis=axis)
    p = jnp.maximum(z - tau_star, 0.0)
    return p * p


def _round_up(x, m):
    return ((x + m - 1) // m) * m


# ---------------------------------------------------------------------------
# Pallas kernel: one fused (gate|value) matmul + GLU + group-sum (VPU adds).
# ---------------------------------------------------------------------------
def abstract_layer_kernel(x_ref, w_ref, shift_ref, o_ref, *, k, o_pad):
    x = x_ref[...]                                           # (Bt, Dp)  bf16
    # Single fused matmul for all k groups, gate + value halves (f32 accum).
    z = jnp.dot(x, w_ref[...], preferred_element_type=jnp.float32)
    z = z + shift_ref[...]                                   # (Bt, 2*k*Op) f32

    kop = k * o_pad
    acc = None
    # k is a small static Python int; every slice below is lane-aligned
    # (multiples of 128), so this is pure VPU/EUP work — no MXU, no masking.
    for i in range(k):
        g = z[:, i * o_pad:(i + 1) * o_pad]                  # gate of group i
        v = z[:, kop + i * o_pad:kop + (i + 1) * o_pad]      # value of group i
        h = jnp.maximum(jax.nn.sigmoid(g) * v, 0.0)          # GLU + ReLU (f32)
        acc = h if acc is None else acc + h
    o_ref[...] = acc.astype(o_ref.dtype)                     # (Bt, Op) lane-dense


def abstract_layer(x, mask_w, fc_w, fc_b, bn_gamma, bn_beta, bn_mean, bn_var,
                   k, base_output_dim, eps=1e-5, block_b=None,
                   matmul_dtype=jnp.bfloat16):
    """x: (B, D) f32 -> (B, base_output_dim) f32 (eval-mode forward)."""
    B, D = x.shape
    O = base_output_dim
    twoO = 2 * O

    # ---------------- parameter folding (all in f32, once per call) ----------
    mask = entmax15(mask_w.astype(jnp.float32), axis=-1)         # (k, D)
    w3 = fc_w.reshape(k, twoO, D).astype(jnp.float32)            # per-group (2O, D)
    b3 = fc_b.reshape(k, twoO).astype(jnp.float32)
    scale = bn_gamma / jnp.sqrt(bn_var + eps)                    # eval-mode BN
    shift = bn_beta - bn_mean * scale
    scale3 = scale.reshape(k, twoO)
    shift3 = shift.reshape(k, twoO)

    w_folded = w3 * mask[:, None, :] * scale3[:, :, None]        # (k, 2O, D)
    shift_folded = b3 * scale3 + shift3                          # (k, 2O)

    # ------------- lane-aligned padded layout (zero rows/cols are free) ------
    D_pad = _round_up(D, 128)
    O_pad = _round_up(O, 128)
    kOp = k * O_pad

    def _layout_w(half):                       # (k, O, D) -> (D_pad, k*O_pad)
        h = jnp.pad(half, ((0, 0), (0, O_pad - O), (0, 0)))
        h = jnp.transpose(h, (2, 0, 1)).reshape(D, kOp)
        return jnp.pad(h, ((0, D_pad - D), (0, 0)))

    def _layout_s(half):                       # (k, O) -> (1, k*O_pad)
        return jnp.pad(half, ((0, 0), (0, O_pad - O))).reshape(1, kOp)

    # Column c = i*O_pad + o  <->  group i, output o.  [ all gates | all values ]
    w_all = jnp.concatenate(
        [_layout_w(w_folded[:, :O, :]), _layout_w(w_folded[:, O:, :])], axis=1)
    s_all = jnp.concatenate(
        [_layout_s(shift_folded[:, :O]), _layout_s(shift_folded[:, O:])], axis=1)

    # Cast matmul operands LAST (fold stayed f32); shifts / GLU remain f32.
    w_all = w_all.astype(matmul_dtype)                            # (Dp, 2*k*Op)

    # ---------------- batch tiling ----------------
    if block_b is None:
        if B <= 512:
            block_b = B                      # single full-extent tile, no pad
        else:
            block_b = 512
            # Prefer a block that divides B (no padded-tail copy of x) and
            # gives >= 2 grid steps so a v7x second TensorCore has work.
            for cand in (1024, 768, 512, 384, 256):
                if B % cand == 0 and B // cand >= 2:
                    block_b = cand
                    break
    block_b = min(block_b, B) if B > 0 else 1

    pad_b = (-B) % block_b
    pad_d = D_pad - D
    x = x.astype(matmul_dtype)
    if pad_b or pad_d:
        x = jnp.pad(x, ((0, pad_b), (0, pad_d)))
    Bp = B + pad_b
    n_blocks = Bp // block_b

    # ---------------- VMEM budget & cost estimate ----------------
    itemsize = jnp.dtype(matmul_dtype).itemsize
    w_bytes = D_pad * (2 * kOp) * itemsize          # Buffered(1): single copy
    s_bytes = (2 * kOp) * 4
    x_tile_bytes = block_b * D_pad * itemsize * 2   # double-buffered
    o_tile_bytes = block_b * O_pad * 4 * 2          # double-buffered
    need = w_bytes + s_bytes + x_tile_bytes + o_tile_bytes
    vmem_limit = int(min(128 * 1024 * 1024, max(32 * 1024 * 1024, 1.5 * need)))

    cost = pl.CostEstimate(
        flops=2 * Bp * D_pad * (2 * kOp) + 4 * Bp * kOp,
        transcendentals=Bp * kOp,                   # sigmoid
        bytes_accessed=(Bp * D_pad * itemsize + w_bytes + s_bytes
                        + Bp * O_pad * 4),
    )

    kernel = functools.partial(abstract_layer_kernel, k=k, o_pad=O_pad)

    out = pl.pallas_call(
        kernel,
        out_shape=jax.ShapeDtypeStruct((Bp, O_pad), jnp.float32),
        grid=(n_blocks,),
        in_specs=[
            pl.BlockSpec((block_b, D_pad), lambda b: (b, 0)),           # x tile
            pl.BlockSpec((D_pad, 2 * kOp), lambda b: (0, 0),            # weights
                         pipeline_mode=pl.Buffered(1)),
            pl.BlockSpec((1, 2 * kOp), lambda b: (0, 0),                # shifts
                         pipeline_mode=pl.Buffered(1)),
        ],
        out_specs=pl.BlockSpec((block_b, O_pad), lambda b: (b, 0)),     # lane-dense
        compiler_params=pltpu.CompilerParams(
            dimension_semantics=("parallel",),
            vmem_limit_bytes=vmem_limit),
        cost_estimate=cost,
    )(x, w_all, s_all)

    return out[:B, :O]


# ---------------------------------------------------------------------------
# Pure-JAX reference (mirrors the PyTorch forward, eval-mode BN, all f32)
# ---------------------------------------------------------------------------
def abstract_layer_ref(x, mask_w, fc_w, fc_b, bn_gamma, bn_beta, bn_mean, bn_var,
                       k, base_output_dim, eps=1e-5):
    B, D = x.shape
    O = base_output_dim
    mask = entmax15(mask_w, axis=-1)                     # (k, D)
    masked = jnp.einsum('nd,bd->bnd', mask, x)           # (B, k, D)
    w3 = fc_w.reshape(k, 2 * O, D)
    z = jnp.einsum('bkd,kod->bko', masked, w3) + fc_b.reshape(k, 2 * O)[None]
    z = z.reshape(B, k * 2 * O)
    z = (z - bn_mean) / jnp.sqrt(bn_var + eps) * bn_gamma + bn_beta
    z = z.reshape(B, k, 2 * O)
    gate = jax.nn.sigmoid(z[:, :, :O])                   # sigmoid(FIRST half) * second
    val = z[:, :, O:]
    return jnp.sum(jnp.maximum(gate * val, 0.0), axis=1)


if __name__ == "__main__":
    # Small shapes consistent with the module.
    B, D, O, k = 8, 32, 16, 4
    virtual_batch_size = 512  # eval-mode GBN -> plain BN with running stats

    key = jax.random.PRNGKey(0)
    k_x, k_mask, k_w, k_b = jax.random.split(key, 4)

    x = jax.random.normal(k_x, (B, D), dtype=jnp.float32)

    # LearnableLocality.weight ~ torch.rand(k, D)  (uniform [0,1))
    mask_w = jax.random.uniform(k_mask, (k, D), dtype=jnp.float32)

    # Conv1d(D*k, 2*k*O, kernel=1, groups=k): weight (2kO, D, 1) with
    # xavier_normal_(gain = sqrt((D*k + 2*k*O)/sqrt(D*k)))
    gain = np.sqrt((D * k + 2 * k * O) / np.sqrt(D * k))
    fan_in, fan_out = D, 2 * k * O
    std = gain * np.sqrt(2.0 / (fan_in + fan_out))
    fc_w = std * jax.random.normal(k_w, (2 * k * O, D), dtype=jnp.float32)
    # Conv bias default init: uniform(-1/sqrt(fan_in), 1/sqrt(fan_in))
    bound = 1.0 / np.sqrt(fan_in)
    fc_b = jax.random.uniform(k_b, (2 * k * O,), dtype=jnp.float32,
                              minval=-bound, maxval=bound)

    # BatchNorm1d(2*k*O) defaults: gamma=1, beta=0, running_mean=0, running_var=1
    bn_gamma = jnp.ones((2 * k * O,), jnp.float32)
    bn_beta = jnp.zeros((2 * k * O,), jnp.float32)
    bn_mean = jnp.zeros((2 * k * O,), jnp.float32)
    bn_var = jnp.ones((2 * k * O,), jnp.float32)

    out = abstract_layer(x, mask_w, fc_w, fc_b, bn_gamma, bn_beta, bn_mean, bn_var,
                         k=k, base_output_dim=O)
    out = jax.block_until_ready(out)

    ref = abstract_layer_ref(x, mask_w, fc_w, fc_b, bn_gamma, bn_beta, bn_mean,
                             bn_var, k=k, base_output_dim=O)
    # bf16 matmul operands (f32 accumulate / GLU) -> slightly loosened tolerance
    np.testing.assert_allclose(np.asarray(out), np.asarray(ref), rtol=2e-2, atol=2e-2)

    print("KERNEL_OK")
</pallas_src>

<mosaic_0001>
module attributes {stable_mosaic.version = 11 : i64} {
  func.func @abstract_layer_kernel(%arg0: i32, %arg1: memref<8x128xbf16, #tpu.memory_space<vmem>>, %arg2: memref<128x1024xbf16, #tpu.memory_space<vmem>>, %arg3: memref<1x1024xf32, #tpu.memory_space<vmem>>, %arg4: memref<8x128xf32, #tpu.memory_space<vmem>>) attributes {dimension_semantics = [#tpu.dimension_semantics<parallel>], iteration_bounds = array<i64: 1>, scalar_prefetch = 0 : i64, scratch_operands = 0 : i64, tpu.core_type = #tpu.core_type<tc>, window_params = [{transform_indices = @transform_0, window_bounds = array<i64: 8, 128>}, {pipeline_mode = #tpu.pipeline_mode<synchronous>, transform_indices = @transform_1, window_bounds = array<i64: 128, 1024>}, {pipeline_mode = #tpu.pipeline_mode<synchronous>, transform_indices = @transform_2, window_bounds = array<i64: 1, 1024>}, {transform_indices = @transform_3, window_bounds = array<i64: 8, 128>}]} {
    %c0 = arith.constant 0 : index
    %c0_0 = arith.constant 0 : index
    %0 = vector.load %arg1[%c0, %c0_0] : memref<8x128xbf16, #tpu.memory_space<vmem>>, vector<8x128xbf16>
    %c0_1 = arith.constant 0 : index
    %c0_2 = arith.constant 0 : index
    %1 = vector.load %arg2[%c0_1, %c0_2] : memref<128x1024xbf16, #tpu.memory_space<vmem>>, vector<128x1024xbf16>
    %cst = arith.constant dense<0.000000e+00> : vector<8x1024xf32>
    %2 = tpu.matmul %0, %1, %cst {dimension_numbers = #tpu.dot_dimension_numbers<[1], [0], [0], [1], [0, 0, 1, 1], [], []>} : vector<8x128xbf16>, vector<128x1024xbf16>, vector<8x1024xf32> -> vector<8x1024xf32>
    %c0_3 = arith.constant 0 : index
    %c0_4 = arith.constant 0 : index
    %3 = vector.load %arg3[%c0_3, %c0_4] : memref<1x1024xf32, #tpu.memory_space<vmem>>, vector<1x1024xf32>
    %4 = vector.broadcast %3 : vector<1x1024xf32> to vector<8x1024xf32>
    %5 = arith.addf %2, %4 : vector<8x1024xf32>
    %6 = vector.extract_strided_slice %5 {offsets = [0, 0], sizes = [8, 128], strides = [1, 1]} : vector<8x1024xf32> to vector<8x128xf32>
    %7 = vector.extract_strided_slice %5 {offsets = [0, 512], sizes = [8, 128], strides = [1, 1]} : vector<8x1024xf32> to vector<8x128xf32>
    %8 = arith.negf %6 : vector<8x128xf32>
    %9 = math.exp %8 : vector<8x128xf32>
    %cst_5 = arith.constant 1.000000e+00 : f32
    %10 = vector.broadcast %cst_5 : f32 to vector<8x128xf32>
    %11 = arith.addf %10, %9 : vector<8x128xf32>
    %12 = arith.divf %10, %11 : vector<8x128xf32>
    %13 = arith.mulf %12, %7 : vector<8x128xf32>
    %cst_6 = arith.constant 0.000000e+00 : f32
    %14 = vector.broadcast %cst_6 : f32 to vector<8x128xf32>
    %15 = arith.maximumf %13, %14 : vector<8x128xf32>
    %16 = vector.extract_strided_slice %5 {offsets = [0, 128], sizes = [8, 128], strides = [1, 1]} : vector<8x1024xf32> to vector<8x128xf32>
    %17 = vector.extract_strided_slice %5 {offsets = [0, 640], sizes = [8, 128], strides = [1, 1]} : vector<8x1024xf32> to vector<8x128xf32>
    %18 = arith.negf %16 : vector<8x128xf32>
    %19 = math.exp %18 : vector<8x128xf32>
    %cst_7 = arith.constant 1.000000e+00 : f32
    %20 = vector.broadcast %cst_7 : f32 to vector<8x128xf32>
    %21 = arith.addf %20, %19 : vector<8x128xf32>
    %22 = arith.divf %20, %21 : vector<8x128xf32>
    %23 = arith.mulf %22, %17 : vector<8x128xf32>
    %cst_8 = arith.constant 0.000000e+00 : f32
    %24 = vector.broadcast %cst_8 : f32 to vector<8x128xf32>
    %25 = arith.maximumf %23, %24 : vector<8x128xf32>
    %26 = arith.addf %15, %25 : vector<8x128xf32>
    %27 = vector.extract_strided_slice %5 {offsets = [0, 256], sizes = [8, 128], strides = [1, 1]} : vector<8x1024xf32> to vector<8x128xf32>
    %28 = vector.extract_strided_slice %5 {offsets = [0, 768], sizes = [8, 128], strides = [1, 1]} : vector<8x1024xf32> to vector<8x128xf32>
    %29 = arith.negf %27 : vector<8x128xf32>
    %30 = math.exp %29 : vector<8x128xf32>
    %cst_9 = arith.constant 1.000000e+00 : f32
    %31 = vector.broadcast %cst_9 : f32 to vector<8x128xf32>
    %32 = arith.addf %31, %30 : vector<8x128xf32>
    %33 = arith.divf %31, %32 : vector<8x128xf32>
    %34 = arith.mulf %33, %28 : vector<8x128xf32>
    %cst_10 = arith.constant 0.000000e+00 : f32
    %35 = vector.broadcast %cst_10 : f32 to vector<8x128xf32>
    %36 = arith.maximumf %34, %35 : vector<8x128xf32>
    %37 = arith.addf %26, %36 : vector<8x128xf32>
    %38 = vector.extract_strided_slice %5 {offsets = [0, 384], sizes = [8, 128], strides = [1, 1]} : vector<8x1024xf32> to vector<8x128xf32>
    %39 = vector.extract_strided_slice %5 {offsets = [0, 896], sizes = [8, 128], strides = [1, 1]} : vector<8x1024xf32> to vector<8x128xf32>
    %40 = arith.negf %38 : vector<8x128xf32>
    %41 = math.exp %40 : vector<8x128xf32>
    %cst_11 = arith.constant 1.000000e+00 : f32
    %42 = vector.broadcast %cst_11 : f32 to vector<8x128xf32>
    %43 = arith.addf %42, %41 : vector<8x128xf32>
    %44 = arith.divf %42, %43 : vector<8x128xf32>
    %45 = arith.mulf %44, %39 : vector<8x128xf32>
    %cst_12 = arith.constant 0.000000e+00 : f32
    %46 = vector.broadcast %cst_12 : f32 to vector<8x128xf32>
    %47 = arith.maximumf %45, %46 : vector<8x128xf32>
    %48 = arith.addf %37, %47 : vector<8x128xf32>
    %c0_13 = arith.constant 0 : index
    %c0_14 = arith.constant 0 : index
    %49 = vector.load %arg4[%c0_13, %c0_14] : memref<8x128xf32, #tpu.memory_space<vmem>>, vector<8x128xf32>
    tpu.vector_store %arg4[%c0_13, %c0_14], %48 {strides = array<i32>} : memref<8x128xf32, #tpu.memory_space<vmem>>, vector<8x128xf32>,
    return
  }
  func.func @transform_0(%arg0: i32) -> (i32, i32) {
    %c0_i32 = arith.constant 0 : i32
    %c0_i32_0 = arith.constant 0 : i32
    return %arg0, %c0_i32 : i32, i32
  }
  func.func @transform_1(%arg0: i32) -> (i32, i32) {
    %c0_i32 = arith.constant 0 : i32
    %c0_i32_0 = arith.constant 0 : i32
    %c0_i32_1 = arith.constant 0 : i32
    return %c0_i32, %c0_i32_0 : i32, i32
  }
  func.func @transform_2(%arg0: i32) -> (i32, i32) {
    %c0_i32 = arith.constant 0 : i32
    %c0_i32_0 = arith.constant 0 : i32
    %c0_i32_1 = arith.constant 0 : i32
    return %c0_i32, %c0_i32_0 : i32, i32
  }
  func.func @transform_3(%arg0: i32) -> (i32, i32) {
    %c0_i32 = arith.constant 0 : i32
    %c0_i32_0 = arith.constant 0 : i32
    return %arg0, %c0_i32 : i32, i32
  }
}

</mosaic_0001>

<llo_original>
// kernel: tpu_custom_call.1
$region0: #{tpu_custom_call.1}
  #allocation0 [shape = 'u32[]', space=smem, size = 0x4, offset = 0x4, fixed_abs, tag = 'smem constant byte address 0x4 - core index']
  #allocation1 [shape = 'u32[144,128]{1,0:T(1,128)}', space=vmem, size = 0x12000, scoped, tag = 'internal scratch']
  %s0 = inlined_call_operand.hbm [shape: bf16[8,128], index: 0, kind: input, shape index: {}]
  %s1 = inlined_call_operand.hbm [shape: bf16[128,1024], index: 1, kind: input, shape index: {}]
  %s2 = inlined_call_operand.hbm [shape: f32[1,1024], index: 2, kind: input, shape index: {}]
  %s3 = inlined_call_operand.hbm [shape: f32[8,128], index: 3, kind: output, shape index: {}]
  %s4 = sld [smem:[#allocation0]]
  $region34: #{tpu_custom_call.1} parent=0
    _
  %s6 = ssub.s32 1, %s4
  %s7 = scalar_select 0, %s6, %s4
  $region1: #{tpu_custom_call.1} parent=0
    #allocation2 [shape = 'u8[2048]{0}', space=vmem, size = 0x800, scoped, tag = 'input window, operand 0, single buffered']
    #allocation3 [shape = 's32[1]{0}', space=sflag, size = 0x4, scoped, tag = 'scoped memory for tpu_custom_call.1']
    #allocation4 [shape = 's32[1]{0}', space=sflag, size = 0x4, scoped, tag = 'scoped memory for tpu_custom_call.1']
    #allocation5 [shape = 'u8[262144]{0}', space=vmem, size = 0x40000, scoped, tag = 'input window, operand 1, single buffered']
    #allocation6 [shape = 's32[1]{0}', space=sflag, size = 0x4, scoped, tag = 'scoped memory for tpu_custom_call.1']
    #allocation7 [shape = 'u8[4096]{0}', space=vmem, size = 0x1000, scoped, tag = 'input window, operand 2, single buffered']
    #allocation8 [shape = 'u8[4096]{0}', space=vmem, size = 0x1000, scoped, tag = 'output window, operand 0, single buffered']
    %8 = vsyncpa [#allocation3], 0
    %9 = vsyncpa [#allocation6], 0
    %10 = vsyncpa [#allocation4], 0
    // Predicated region
    $region2: #{tpu_custom_call.1} parent=1 // pred_check
      _
    $region3: #{tpu_custom_call.1} parent=1 // pred_check_branch
      %12 = sbr.rel (0) target = $region5
    $region4: #{tpu_custom_call.1} parent=1 // pred_region
      %s14 = ssub.s32 64, 64
      %15 = vsyncadd [#allocation3], %s14
      %s17 = sshll.u32 [#allocation2], 4
      %s18 = int_to_ptr.vmem [resolvable:$true] %s17
      %20 = dma.hbm_to_vmem [thread:$0]  %s0, 64, %s18, [#allocation3]
    $region5: #{tpu_custom_call.1} parent=1 // pred_fallthru
      _
    // Predicated region
    $region6: #{tpu_custom_call.1} parent=1 // pred_check
      _
    $region7: #{tpu_custom_call.1} parent=1 // pred_check_branch
      %22 = sbr.rel (0) target = $region9
    $region8: #{tpu_custom_call.1} parent=1 // pred_region
      %s24 = ssub.s32 8192, 8192
      %25 = vsyncadd [#allocation6], %s24
      %s26 = sshll.u32 [#allocation5], 4
      %s27 = int_to_ptr.vmem [resolvable:$true] %s26
      %32 = dma.hbm_to_vmem [thread:$0]  %s1, 8192, %s27, [#allocation6], 512, 512, 32
    $region9: #{tpu_custom_call.1} parent=1 // pred_fallthru
      _
    // Predicated region
    $region10: #{tpu_custom_call.1} parent=1 // pred_check
      _
    $region11: #{tpu_custom_call.1} parent=1 // pred_check_branch
      %34 = sbr.rel (0) target = $region13
    $region12: #{tpu_custom_call.1} parent=1 // pred_region
      %s36 = ssub.s32 128, 128
      %37 = vsyncadd [#allocation6], %s36
      %s39 = sshll.u32 [#allocation7], 4
      %s40 = int_to_ptr.vmem [resolvable:$true] %s39
      %42 = dma.hbm_to_vmem [thread:$0]  %s2, 128, %s40, [#allocation6]
    $region13: #{tpu_custom_call.1} parent=1 // pred_fallthru
      _
    // Predicated region
    $region14: #{tpu_custom_call.1} parent=1 // pred_check
      _
    $region15: #{tpu_custom_call.1} parent=1 // pred_check_branch
      %44 = sbr.rel (0) target = $region17
    $region16: #{tpu_custom_call.1} parent=1 // pred_region
      %45 = dma.done [#allocation3], 64
    $region17: #{tpu_custom_call.1} parent=1 // pred_fallthru
      _
    // Predicated region
    $region18: #{tpu_custom_call.1} parent=1 // pred_check
      _
    $region19: #{tpu_custom_call.1} parent=1 // pred_check_branch
      %47 = sbr.rel (0) target = $region21
    $region20: #{tpu_custom_call.1} parent=1 // pred_region
      %48 = dma.done [#allocation6], 8192
    $region21: #{tpu_custom_call.1} parent=1 // pred_fallthru
      _
    // Predicated region
    $region22: #{tpu_custom_call.1} parent=1 // pred_check
      _
    $region23: #{tpu_custom_call.1} parent=1 // pred_check_branch
      %50 = sbr.rel (0) target = $region25
    $region24: #{tpu_custom_call.1} parent=1 // pred_region
      %51 = dma.done [#allocation6], 128
    $region25: #{tpu_custom_call.1} parent=1 // pred_fallthru
      _
    %v53 = vld [vmem:[#allocation2] sm:$0xf]
    %v54 = vld [vmem:[#allocation5] sm:$0xff]
    %v55 = vld [vmem:[#allocation5 + $0x8] sm:$0xff]
    %v56 = vld [vmem:[#allocation5 + $0x10] sm:$0xff]
    %v57 = vld [vmem:[#allocation5 + $0x18] sm:$0xff]
    %v58 = vld [vmem:[#allocation5 + $0x20] sm:$0xff]
    %v59 = vld [vmem:[#allocation5 + $0x28] sm:$0xff]
    %v60 = vld [vmem:[#allocation5 + $0x30] sm:$0xff]
    %v61 = vld [vmem:[#allocation5 + $0x38] sm:$0xff]
    %v62 = vld [vmem:[#allocation5 + $0x40] sm:$0xff]
    %v63 = vld [vmem:[#allocation5 + $0x48] sm:$0xff]
    %v64 = vld [vmem:[#allocation5 + $0x50] sm:$0xff]
    %v65 = vld [vmem:[#allocation5 + $0x58] sm:$0xff]
    %v66 = vld [vmem:[#allocation5 + $0x60] sm:$0xff]
    %v67 = vld [vmem:[#allocation5 + $0x68] sm:$0xff]
    %v68 = vld [vmem:[#allocation5 + $0x70] sm:$0xff]
    %v69 = vld [vmem:[#allocation5 + $0x78] sm:$0xff]
    %v70 = vld [vmem:[#allocation5 + $0x80] sm:$0xff]
    %v71 = vld [vmem:[#allocation5 + $0x88] sm:$0xff]
    %v72 = vld [vmem:[#allocation5 + $0x90] sm:$0xff]
    %v73 = vld [vmem:[#allocation5 + $0x98] sm:$0xff]
    %v74 = vld [vmem:[#allocation5 + $0xa0] sm:$0xff]
    %v75 = vld [vmem:[#allocation5 + $0xa8] sm:$0xff]
    %v76 = vld [vmem:[#allocation5 + $0xb0] sm:$0xff]
    %v77 = vld [vmem:[#allocation5 + $0xb8] sm:$0xff]
    %v78 = vld [vmem:[#allocation5 + $0xc0] sm:$0xff]
    %v79 = vld [vmem:[#allocation5 + $0xc8] sm:$0xff]
    %v80 = vld [vmem:[#allocation5 + $0xd0] sm:$0xff]
    %v81 = vld [vmem:[#allocation5 + $0xd8] sm:$0xff]
    %v82 = vld [vmem:[#allocation5 + $0xe0] sm:$0xff]
    %v83 = vld [vmem:[#allocation5 + $0xe8] sm:$0xff]
    %v84 = vld [vmem:[#allocation5 + $0xf0] sm:$0xff]
    %v85 = vld [vmem:[#allocation5 + $0xf8] sm:$0xff]
    %v86 = vld [vmem:[#allocation5 + $0x100] sm:$0xff]
    %v87 = vld [vmem:[#allocation5 + $0x108] sm:$0xff]
    %v88 = vld [vmem:[#allocation5 + $0x110] sm:$0xff]
    %v89 = vld [vmem:[#allocation5 + $0x118] sm:$0xff]
    %v90 = vld [vmem:[#allocation5 + $0x120] sm:$0xff]
    %v91 = vld [vmem:[#allocation5 + $0x128] sm:$0xff]
    %v92 = vld [vmem:[#allocation5 + $0x130] sm:$0xff]
    %v93 = vld [vmem:[#allocation5 + $0x138] sm:$0xff]
    %v94 = vld [vmem:[#allocation5 + $0x140] sm:$0xff]
    %v95 = vld [vmem:[#allocation5 + $0x148] sm:$0xff]
    %v96 = vld [vmem:[#allocation5 + $0x150] sm:$0xff]
    %v97 = vld [vmem:[#allocation5 + $0x158] sm:$0xff]
    %v98 = vld [vmem:[#allocation5 + $0x160] sm:$0xff]
    %v99 = vld [vmem:[#allocation5 + $0x168] sm:$0xff]
    %v100 = vld [vmem:[#allocation5 + $0x170] sm:$0xff]
    %v101 = vld [vmem:[#allocation5 + $0x178] sm:$0xff]
    %v102 = vld [vmem:[#allocation5 + $0x180] sm:$0xff]
    %v103 = vld [vmem:[#allocation5 + $0x188] sm:$0xff]
    %v104 = vld [vmem:[#allocation5 + $0x190] sm:$0xff]
    %v105 = vld [vmem:[#allocation5 + $0x198] sm:$0xff]
    %v106 = vld [vmem:[#allocation5 + $0x1a0] sm:$0xff]
    %v107 = vld [vmem:[#allocation5 + $0x1a8] sm:$0xff]
    %v108 = vld [vmem:[#allocation5 + $0x1b0] sm:$0xff]
    %v109 = vld [vmem:[#allocation5 + $0x1b8] sm:$0xff]
    %v110 = vld [vmem:[#allocation5 + $0x1c0] sm:$0xff]
    %v111 = vld [vmem:[#allocation5 + $0x1c8] sm:$0xff]
    %v112 = vld [vmem:[#allocation5 + $0x1d0] sm:$0xff]
    %v113 = vld [vmem:[#allocation5 + $0x1d8] sm:$0xff]
    %v114 = vld [vmem:[#allocation5 + $0x1e0] sm:$0xff]
    %v115 = vld [vmem:[#allocation5 + $0x1e8] sm:$0xff]
    %v116 = vld [vmem:[#allocation5 + $0x1f0] sm:$0xff]
    %v117 = vld [vmem:[#allocation5 + $0x1f8] sm:$0xff]
    %v118 = vld [vmem:[#allocation7] sm:$0xff]
    %v120 = vlaneseq
    %v121 = vshrl.u32 %v120, 7
    %v122 = vsub.s32 0, %v121
    %v123 = vrot.slane %v118, %v122
    %v124 = vlaneseq
    %v125 = vshrl.u32 %v124, 7
    %v126 = vsub.s32 1, %v125
    %v127 = vrot.slane %v118, %v126
    %v128 = vlaneseq
    %v129 = vshrl.u32 %v128, 7
    %v130 = vsub.s32 2, %v129
    %v131 = vrot.slane %v118, %v130
    %v132 = vlaneseq
    %v133 = vshrl.u32 %v132, 7
    %v134 = vsub.s32 3, %v133
    %v135 = vrot.slane %v118, %v134
    %v136 = vlaneseq
    %v137 = vshrl.u32 %v136, 7
    %v138 = vsub.s32 4, %v137
    %v139 = vrot.slane %v118, %v138
    %v140 = vlaneseq
    %v141 = vshrl.u32 %v140, 7
    %v142 = vsub.s32 5, %v141
    %v143 = vrot.slane %v118, %v142
    %v144 = vlaneseq
    %v145 = vshrl.u32 %v144, 7
    %v146 = vsub.s32 6, %v145
    %v147 = vrot.slane %v118, %v146
    %v148 = vlaneseq
    %v149 = vshrl.u32 %v148, 7
    %v150 = vsub.s32 7, %v149
    %v151 = vrot.slane %v118, %v150
    %v224 = vunpack.c.l.b16 %v54
    %v225 = vunpack.c.h.b16 %v54
    %v226 = vunpack.c.l.b16 %v55
    %v227 = vunpack.c.h.b16 %v55
    %v228 = vunpack.c.l.b16 %v56
    %v229 = vunpack.c.h.b16 %v56
    %v230 = vunpack.c.l.b16 %v57
    %v231 = vunpack.c.h.b16 %v57
    %v232 = vunpack.c.l.b16 %v58
    %v233 = vunpack.c.h.b16 %v58
    %v234 = vunpack.c.l.b16 %v59
    %v235 = vunpack.c.h.b16 %v59
    %v236 = vunpack.c.l.b16 %v60
    %v237 = vunpack.c.h.b16 %v60
    %v238 = vunpack.c.l.b16 %v61
    %v239 = vunpack.c.h.b16 %v61
    %v240 = vunpack.c.l.b16 %v62
    %v241 = vunpack.c.h.b16 %v62
    %v242 = vunpack.c.l.b16 %v63
    %v243 = vunpack.c.h.b16 %v63
    %v244 = vunpack.c.l.b16 %v64
    %v245 = vunpack.c.h.b16 %v64
    %v246 = vunpack.c.l.b16 %v65
    %v247 = vunpack.c.h.b16 %v65
    %v248 = vunpack.c.l.b16 %v66
    %v249 = vunpack.c.h.b16 %v66
    %v250 = vunpack.c.l.b16 %v67
    %v251 = vunpack.c.h.b16 %v67
    %v252 = vunpack.c.l.b16 %v68
    %v253 = vunpack.c.h.b16 %v68
    %v254 = vunpack.c.l.b16 %v69
    %v255 = vunpack.c.h.b16 %v69
    %v256 = vunpack.c.l.b16 %v70
    %v257 = vunpack.c.h.b16 %v70
    %v258 = vunpack.c.l.b16 %v71
    %v259 = vunpack.c.h.b16 %v71
    %v260 = vunpack.c.l.b16 %v72
    %v261 = vunpack.c.h.b16 %v72
    %v262 = vunpack.c.l.b16 %v73
    %v263 = vunpack.c.h.b16 %v73
    %v264 = vunpack.c.l.b16 %v74
    %v265 = vunpack.c.h.b16 %v74
    %v266 = vunpack.c.l.b16 %v75
    %v267 = vunpack.c.h.b16 %v75
    %v268 = vunpack.c.l.b16 %v76
    %v269 = vunpack.c.h.b16 %v76
    %v270 = vunpack.c.l.b16 %v77
    %v271 = vunpack.c.h.b16 %v77
    %v272 = vunpack.c.l.b16 %v78
    %v273 = vunpack.c.h.b16 %v78
    %v274 = vunpack.c.l.b16 %v79
    %v275 = vunpack.c.h.b16 %v79
    %v276 = vunpack.c.l.b16 %v80
    %v277 = vunpack.c.h.b16 %v80
    %v278 = vunpack.c.l.b16 %v81
    %v279 = vunpack.c.h.b16 %v81
    %v280 = vunpack.c.l.b16 %v82
    %v281 = vunpack.c.h.b16 %v82
    %v282 = vunpack.c.l.b16 %v83
    %v283 = vunpack.c.h.b16 %v83
    %v284 = vunpack.c.l.b16 %v84
    %v285 = vunpack.c.h.b16 %v84
    %v286 = vunpack.c.l.b16 %v85
    %v287 = vunpack.c.h.b16 %v85
    %v288 = vunpack.c.l.b16 %v86
    %v289 = vunpack.c.h.b16 %v86
    %v290 = vunpack.c.l.b16 %v87
    %v291 = vunpack.c.h.b16 %v87
    %v292 = vunpack.c.l.b16 %v88
    %v293 = vunpack.c.h.b16 %v88
    %v294 = vunpack.c.l.b16 %v89
    %v295 = vunpack.c.h.b16 %v89
    %v296 = vunpack.c.l.b16 %v90
    %v297 = vunpack.c.h.b16 %v90
    %v298 = vunpack.c.l.b16 %v91
    %v299 = vunpack.c.h.b16 %v91
    %v300 = vunpack.c.l.b16 %v92
    %v301 = vunpack.c.h.b16 %v92
    %v302 = vunpack.c.l.b16 %v93
    %v303 = vunpack.c.h.b16 %v93
    %v304 = vunpack.c.l.b16 %v94
    %v305 = vunpack.c.h.b16 %v94
    %v306 = vunpack.c.l.b16 %v95
    %v307 = vunpack.c.h.b16 %v95
    %v308 = vunpack.c.l.b16 %v96
    %v309 = vunpack.c.h.b16 %v96
    %v310 = vunpack.c.l.b16 %v97
    %v311 = vunpack.c.h.b16 %v97
    %v312 = vunpack.c.l.b16 %v98
    %v313 = vunpack.c.h.b16 %v98
    %v314 = vunpack.c.l.b16 %v99
    %v315 = vunpack.c.h.b16 %v99
    %v316 = vunpack.c.l.b16 %v100
    %v317 = vunpack.c.h.b16 %v100
    %v318 = vunpack.c.l.b16 %v101
    %v319 = vunpack.c.h.b16 %v101
    %v320 = vunpack.c.l.b16 %v102
    %v321 = vunpack.c.h.b16 %v102
    %v322 = vunpack.c.l.b16 %v103
    %v323 = vunpack.c.h.b16 %v103
    %v324 = vunpack.c.l.b16 %v104
    %v325 = vunpack.c.h.b16 %v104
    %v326 = vunpack.c.l.b16 %v105
    %v327 = vunpack.c.h.b16 %v105
    %v328 = vunpack.c.l.b16 %v106
    %v329 = vunpack.c.h.b16 %v106
    %v330 = vunpack.c.l.b16 %v107
    %v331 = vunpack.c.h.b16 %v107
    %v332 = vunpack.c.l.b16 %v108
    %v333 = vunpack.c.h.b16 %v108
    %v334 = vunpack.c.l.b16 %v109
    %v335 = vunpack.c.h.b16 %v109
    %v336 = vunpack.c.l.b16 %v110
    %v337 = vunpack.c.h.b16 %v110
    %v338 = vunpack.c.l.b16 %v111
    %v339 = vunpack.c.h.b16 %v111
    %v340 = vunpack.c.l.b16 %v112
    %v341 = vunpack.c.h.b16 %v112
    %v342 = vunpack.c.l.b16 %v113
    %v343 = vunpack.c.h.b16 %v113
    %v344 = vunpack.c.l.b16 %v114
    %v345 = vunpack.c.h.b16 %v114
    %v346 = vunpack.c.l.b16 %v115
    %v347 = vunpack.c.h.b16 %v115
    %v348 = vunpack.c.l.b16 %v116
    %v349 = vunpack.c.h.b16 %v116
    %v350 = vunpack.c.l.b16 %v117
    %v351 = vunpack.c.h.b16 %v117
    %v352 = vpack.c.b16 %v232, %v224
    %v353 = vpack.c.b16 %v233, %v225
    %v354 = vpack.c.b16 %v234, %v226
    %v355 = vpack.c.b16 %v235, %v227
    %v356 = vpack.c.b16 %v236, %v228
    %v357 = vpack.c.b16 %v237, %v229
    %v358 = vpack.c.b16 %v238, %v230
    %v359 = vpack.c.b16 %v239, %v231
    %v360 = vpack.c.b16 %v248, %v240
    %v361 = vpack.c.b16 %v249, %v241
    %v362 = vpack.c.b16 %v250, %v242
    %v363 = vpack.c.b16 %v251, %v243
    %v364 = vpack.c.b16 %v252, %v244
    %v365 = vpack.c.b16 %v253, %v245
    %v366 = vpack.c.b16 %v254, %v246
    %v367 = vpack.c.b16 %v255, %v247
    %v368 = vpack.c.b16 %v264, %v256
    %v369 = vpack.c.b16 %v265, %v257
    %v370 = vpack.c.b16 %v266, %v258
    %v371 = vpack.c.b16 %v267, %v259
    %v372 = vpack.c.b16 %v268, %v260
    %v373 = vpack.c.b16 %v269, %v261
    %v374 = vpack.c.b16 %v270, %v262
    %v375 = vpack.c.b16 %v271, %v263
    %v376 = vpack.c.b16 %v280, %v272
    %v377 = vpack.c.b16 %v281, %v273
    %v378 = vpack.c.b16 %v282, %v274
    %v379 = vpack.c.b16 %v283, %v275
    %v380 = vpack.c.b16 %v284, %v276
    %v381 = vpack.c.b16 %v285, %v277
    %v382 = vpack.c.b16 %v286, %v278
    %v383 = vpack.c.b16 %v287, %v279
    %v384 = vpack.c.b16 %v296, %v288
    %v385 = vpack.c.b16 %v297, %v289
    %v386 = vpack.c.b16 %v298, %v290
    %v387 = vpack.c.b16 %v299, %v291
    %v388 = vpack.c.b16 %v300, %v292
    %v389 = vpack.c.b16 %v301, %v293
    %v390 = vpack.c.b16 %v302, %v294
    %v391 = vpack.c.b16 %v303, %v295
    %v392 = vpack.c.b16 %v312, %v304
    %v393 = vpack.c.b16 %v313, %v305
    %v394 = vpack.c.b16 %v314, %v306
    %v395 = vpack.c.b16 %v315, %v307
    %v396 = vpack.c.b16 %v316, %v308
    %v397 = vpack.c.b16 %v317, %v309
    %v398 = vpack.c.b16 %v318, %v310
    %v399 = vpack.c.b16 %v319, %v311
    %v400 = vpack.c.b16 %v328, %v320
    %v401 = vpack.c.b16 %v329, %v321
    %v402 = vpack.c.b16 %v330, %v322
    %v403 = vpack.c.b16 %v331, %v323
    %v404 = vpack.c.b16 %v332, %v324
    %v405 = vpack.c.b16 %v333, %v325
    %v406 = vpack.c.b16 %v334, %v326
    %v407 = vpack.c.b16 %v335, %v327
    %v408 = vpack.c.b16 %v344, %v336
    %v409 = vpack.c.b16 %v345, %v337
    %v410 = vpack.c.b16 %v346, %v338
    %v411 = vpack.c.b16 %v347, %v339
    %v412 = vpack.c.b16 %v348, %v340
    %v413 = vpack.c.b16 %v349, %v341
    %v414 = vpack.c.b16 %v350, %v342
    %v415 = vpack.c.b16 %v351, %v343
    %480 = vmatprep.subr.bf16.mxu0 %v353
    %481 = vmatpush1.bf16.msra.mxu0 %v352
    %482 = vmatprep.subr.bf16.mxu0 %v361
    %483 = vmatpush1.bf16.msra.mxu0 %v360
    %484 = vmatprep.subr.bf16.mxu0 %v369
    %485 = vmatpush1.bf16.msra.mxu0 %v368
    %486 = vmatprep.subr.bf16.mxu0 %v377
    %487 = vmatpush1.bf16.msra.mxu0 %v376
    %488 = vmatprep.subr.bf16.mxu0 %v385
    %489 = vmatpush1.bf16.msra.mxu0 %v384
    %490 = vmatprep.subr.bf16.mxu0 %v393
    %491 = vmatpush1.bf16.msra.mxu0 %v392
    %492 = vmatprep.subr.bf16.mxu0 %v401
    %493 = vmatpush1.bf16.msra.mxu0 %v400
    %494 = vmatprep.subr.bf16.mxu0 %v409
    %495 = vmatpush1.bf16.msra.mxu0 %v408
    %496 = vmatprep.subr.bf16.mxu0 0
    %497 = vmatpush1.bf16.msra.mxu0 0
    %498 = vmatprep.subr.bf16.mxu0 0
    %499 = vmatpush1.bf16.msra.mxu0 0
    %500 = vmatprep.subr.bf16.mxu0 0
    %501 = vmatpush1.bf16.msra.mxu0 0
    %502 = vmatprep.subr.bf16.mxu0 0
    %503 = vmatpush1.bf16.msra.mxu0 0
    %504 = vmatprep.subr.bf16.mxu0 0
    %505 = vmatpush1.bf16.msra.mxu0 0
    %506 = vmatprep.subr.bf16.mxu0 0
    %507 = vmatpush1.bf16.msra.mxu0 0
    %508 = vmatprep.subr.bf16.mxu0 0
    %509 = vmatpush1.bf16.msra.mxu0 0
    %510 = vmatprep.subr.bf16.mxu0 0
    %511 = vmatpush1.bf16.msra.mxu0 0
    %512 = vmatprep.mubr.bf16.mxu0 0
    %513 = vmatmul.mubr.bf16.gmra.mrb[0].mxu0 %v53
    %v514 = vpop.f32.mrb[0].mxu0
    %v515 = vadd.f32 %v123, %v514
    %v516 = vpop.f32.mrb[0].mxu0
    %v517 = vadd.f32 %v127, %v516
    %v518 = vpop.f32.mrb[0].mxu0
    %v519 = vpop.f32.mrb[0].mxu0
    %520 = vdwg.mxu0
    %521 = vmatprep.subr.bf16.mxu0 %v355
    %522 = vmatpush1.bf16.msra.mxu0 %v354
    %523 = vmatprep.subr.bf16.mxu0 %v363
    %524 = vmatpush1.bf16.msra.mxu0 %v362
    %525 = vmatprep.subr.bf16.mxu0 %v371
    %526 = vmatpush1.bf16.msra.mxu0 %v370
    %527 = vmatprep.subr.bf16.mxu0 %v379
    %528 = vmatpush1.bf16.msra.mxu0 %v378
    %529 = vmatprep.subr.bf16.mxu0 %v387
    %530 = vmatpush1.bf16.msra.mxu0 %v386
    %531 = vmatprep.subr.bf16.mxu0 %v395
    %532 = vmatpush1.bf16.msra.mxu0 %v394
    %533 = vmatprep.subr.bf16.mxu0 %v403
    %534 = vmatpush1.bf16.msra.mxu0 %v402
    %535 = vmatprep.subr.bf16.mxu0 %v411
    %536 = vmatpush1.bf16.msra.mxu0 %v410
    %537 = vmatprep.subr.bf16.mxu0 0
    %538 = vmatpush1.bf16.msra.mxu0 0
    %539 = vmatprep.subr.bf16.mxu0 0
    %540 = vmatpush1.bf16.msra.mxu0 0
    %541 = vmatprep.subr.bf16.mxu0 0
    %542 = vmatpush1.bf16.msra.mxu0 0
    %543 = vmatprep.subr.bf16.mxu0 0
    %544 = vmatpush1.bf16.msra.mxu0 0
    %545 = vmatprep.subr.bf16.mxu0 0
    %546 = vmatpush1.bf16.msra.mxu0 0
    %547 = vmatprep.subr.bf16.mxu0 0
    %548 = vmatpush1.bf16.msra.mxu0 0
    %549 = vmatprep.subr.bf16.mxu0 0
    %550 = vmatpush1.bf16.msra.mxu0 0
    %551 = vmatprep.subr.bf16.mxu0 0
    %552 = vmatpush1.bf16.msra.mxu0 0
    %553 = vmatprep.mubr.bf16.mxu0 0
    %554 = vmatmul.mubr.bf16.gmra.mrb[0].mxu0 %v53
    %v555 = vpop.f32.mrb[0].mxu0
    %v556 = vadd.f32 %v131, %v555
    %v557 = vpop.f32.mrb[0].mxu0
    %v558 = vadd.f32 %v135, %v557
    %v559 = vpop.f32.mrb[0].mxu0
    %v560 = vpop.f32.mrb[0].mxu0
    %561 = vdwg.mxu0
    %562 = vmatprep.subr.bf16.mxu0 %v357
    %563 = vmatpush1.bf16.msra.mxu0 %v356
    %564 = vmatprep.subr.bf16.mxu0 %v365
    %565 = vmatpush1.bf16.msra.mxu0 %v364
    %566 = vmatprep.subr.bf16.mxu0 %v373
    %567 = vmatpush1.bf16.msra.mxu0 %v372
    %568 = vmatprep.subr.bf16.mxu0 %v381
    %569 = vmatpush1.bf16.msra.mxu0 %v380
    %570 = vmatprep.subr.bf16.mxu0 %v389
    %571 = vmatpush1.bf16.msra.mxu0 %v388
    %572 = vmatprep.subr.bf16.mxu0 %v397
    %573 = vmatpush1.bf16.msra.mxu0 %v396
    %574 = vmatprep.subr.bf16.mxu0 %v405
    %575 = vmatpush1.bf16.msra.mxu0 %v404
    %576 = vmatprep.subr.bf16.mxu0 %v413
    %577 = vmatpush1.bf16.msra.mxu0 %v412
    %578 = vmatprep.subr.bf16.mxu0 0
    %579 = vmatpush1.bf16.msra.mxu0 0
    %580 = vmatprep.subr.bf16.mxu0 0
    %581 = vmatpush1.bf16.msra.mxu0 0
    %582 = vmatprep.subr.bf16.mxu0 0
    %583 = vmatpush1.bf16.msra.mxu0 0
    %584 = vmatprep.subr.bf16.mxu0 0
    %585 = vmatpush1.bf16.msra.mxu0 0
    %586 = vmatprep.subr.bf16.mxu0 0
    %587 = vmatpush1.bf16.msra.mxu0 0
    %588 = vmatprep.subr.bf16.mxu0 0
    %589 = vmatpush1.bf16.msra.mxu0 0
    %590 = vmatprep.subr.bf16.mxu0 0
    %591 = vmatpush1.bf16.msra.mxu0 0
    %592 = vmatprep.subr.bf16.mxu0 0
    %593 = vmatpush1.bf16.msra.mxu0 0
    %594 = vmatprep.mubr.bf16.mxu0 0
    %595 = vmatmul.mubr.bf16.gmra.mrb[0].mxu0 %v53
    %v596 = vpop.f32.mrb[0].mxu0
    %v597 = vadd.f32 %v139, %v596
    %v598 = vpop.f32.mrb[0].mxu0
    %v599 = vadd.f32 %v143, %v598
    %v600 = vpop.f32.mrb[0].mxu0
    %v601 = vpop.f32.mrb[0].mxu0
    %602 = vdwg.mxu0
    %603 = vmatprep.subr.bf16.mxu0 %v359
    %604 = vmatpush1.bf16.msra.mxu0 %v358
    %605 = vmatprep.subr.bf16.mxu0 %v367
    %606 = vmatpush1.bf16.msra.mxu0 %v366
    %607 = vmatprep.subr.bf16.mxu0 %v375
    %608 = vmatpush1.bf16.msra.mxu0 %v374
    %609 = vmatprep.subr.bf16.mxu0 %v383
    %610 = vmatpush1.bf16.msra.mxu0 %v382
    %611 = vmatprep.subr.bf16.mxu0 %v391
    %612 = vmatpush1.bf16.msra.mxu0 %v390
    %613 = vmatprep.subr.bf16.mxu0 %v399
    %614 = vmatpush1.bf16.msra.mxu0 %v398
    %615 = vmatprep.subr.bf16.mxu0 %v407
    %616 = vmatpush1.bf16.msra.mxu0 %v406
    %617 = vmatprep.subr.bf16.mxu0 %v415
    %618 = vmatpush1.bf16.msra.mxu0 %v414
    %619 = vmatprep.subr.bf16.mxu0 0
    %620 = vmatpush1.bf16.msra.mxu0 0
    %621 = vmatprep.subr.bf16.mxu0 0
    %622 = vmatpush1.bf16.msra.mxu0 0
    %623 = vmatprep.subr.bf16.mxu0 0
    %624 = vmatpush1.bf16.msra.mxu0 0
    %625 = vmatprep.subr.bf16.mxu0 0
    %626 = vmatpush1.bf16.msra.mxu0 0
    %627 = vmatprep.subr.bf16.mxu0 0
    %628 = vmatpush1.bf16.msra.mxu0 0
    %629 = vmatprep.subr.bf16.mxu0 0
    %630 = vmatpush1.bf16.msra.mxu0 0
    %631 = vmatprep.subr.bf16.mxu0 0
    %632 = vmatpush1.bf16.msra.mxu0 0
    %633 = vmatprep.subr.bf16.mxu0 0
    %634 = vmatpush1.bf16.msra.mxu0 0
    %635 = vmatprep.mubr.bf16.mxu0 0
    %636 = vmatmul.mubr.bf16.gmra.mrb[0].mxu0 %v53
    %v637 = vpop.f32.mrb[0].mxu0
    %v638 = vadd.f32 %v147, %v637
    %v639 = vpop.f32.mrb[0].mxu0
    %v640 = vadd.f32 %v151, %v639
    %v641 = vpop.f32.mrb[0].mxu0
    %v642 = vpop.f32.mrb[0].mxu0
    %643 = vdwg.mxu0
    %v644 = vxor.u32 %v515, 2147483648
    %v645 = vmul.f32 %v644, 1.442695
    %v646 = vpow.pop %v645
    %v647 = vadd.f32 %v646, 1.0
    %v648 = vrcp.pop %v647
    %v649 = vmul.f32 1.0, %v648
    %v650 = vmul.f32 %v649, %v597
    %v651 = vmax.f32 %v650, 0.0
    %v652 = vxor.u32 %v517, 2147483648
    %v653 = vmul.f32 %v652, 1.442695
    %v654 = vpow.pop %v653
    %v655 = vadd.f32 %v654, 1.0
    %v656 = vrcp.pop %v655
    %v657 = vmul.f32 1.0, %v656
    %v658 = vmul.f32 %v657, %v599
    %v659 = vmax.f32 %v658, 0.0
    %v660 = vadd.f32 %v651, %v659
    %v661 = vxor.u32 %v556, 2147483648
    %v662 = vmul.f32 %v661, 1.442695
    %v663 = vpow.pop %v662
    %v664 = vadd.f32 %v663, 1.0
    %v665 = vrcp.pop %v664
    %v666 = vmul.f32 1.0, %v665
    %v667 = vmul.f32 %v666, %v638
    %v668 = vmax.f32 %v667, 0.0
    %v669 = vadd.f32 %v660, %v668
    %v670 = vxor.u32 %v558, 2147483648
    %v671 = vmul.f32 %v670, 1.442695
    %v672 = vpow.pop %v671
    %v673 = vadd.f32 %v672, 1.0
    %v674 = vrcp.pop %v673
    %v675 = vmul.f32 1.0, %v674
    %v676 = vmul.f32 %v675, %v640
    %v677 = vmax.f32 %v676, 0.0
    %v678 = vadd.f32 %v669, %v677
    %679 = vst [vmem:[#allocation8] sm:$0xff] %v678
    // Predicated region
    $region26: #{tpu_custom_call.1} parent=1 // pred_check
      _
    $region27: #{tpu_custom_call.1} parent=1 // pred_check_branch
      %681 = sbr.rel (0) target = $region29
    $region28: #{tpu_custom_call.1} parent=1 // pred_region
      %s683 = ssub.s32 128, 128
      %684 = vsyncadd [#allocation4], %s683
      %s686 = sshll.u32 [#allocation8], 4
      %s687 = int_to_ptr.vmem [resolvable:$true] %s686
      %689 = dma.vmem_to_hbm [thread:$0]  %s687, 128, %s3, [#allocation4]
    $region29: #{tpu_custom_call.1} parent=1 // pred_fallthru
      _
    // Predicated region
    $region30: #{tpu_custom_call.1} parent=1 // pred_check
      _
    $region31: #{tpu_custom_call.1} parent=1 // pred_check_branch
      %691 = sbr.rel (0) target = $region33
    $region32: #{tpu_custom_call.1} parent=1 // pred_region
      %692 = dma.done [#allocation4], 128
    $region33: #{tpu_custom_call.1} parent=1 // pred_fallthru
      _
    %693 = vsyncpa [#allocation3], 1
    %694 = vsyncpa [#allocation6], 1
    %695 = vsyncpa [#allocation4], 1

</llo_original>
